<compile_context>
chip_gen: v6e
topology: v6e:2x2x1
jax: 0.10.0
libtpu: 0.0.40
codegen_flags: <defaults>
</compile_context>

<pallas_src>
import functools

import numpy as np
import jax
import jax.numpy as jnp
from jax.experimental import pallas as pl
from jax.experimental.pallas import tpu as pltpu

# ----------------------------- configuration --------------------------------
IO_DIM = 2      # dimensionality of z
HIDDEN = 64     # UWBNet hidden_dim (PyTorch default)
WIDTH = 8       # number of hyper-network "width" components
N = 128         # batch size (any N works; multiples of 128 are lane-densest)


# ------------------------ fused CNF forward kernel ---------------------------
def cnf_fused_kernel(t_ref, w1_ref, b1_ref, w2_ref, b2_ref, w3p_ref, b3p_ref,
                     zT_ref, out_ref, *, width, io_dim):
    """One kernel: UWBNet(t) hyper-MLP + dz/dt + exact Jacobian trace.

    Layouts:
      t_ref              : (1, 1)  f32 in SMEM (scalar time)
      w1/b1/w2/b2        : PyTorch Linear shapes (biases as columns)
      w3p/b3p            : last Linear with rows permuted role-major and the
                           u-rows pre-scaled by 1/width (done in the wrapper)
      zT_ref             : (io_dim, N)      -- batch on the 128-lane axis
      out_ref            : (io_dim + 1, N)  -- rows 0..io_dim-1 = dz_dt^T,
                                               row io_dim       = dlogpz_dt^T
    """
    bs = width * io_dim
    n = zT_ref.shape[1]

    # ---- hyper-net UWBNet(t); uwb lands as a role-major (OUT, 1) column ----
    t = t_ref[0, 0]                                                     # scalar (SMEM)
    h1 = jnp.tanh(t * w1_ref[...] + b1_ref[...])                        # (H, 1)
    h2 = jnp.tanh(
        jnp.dot(w2_ref[...], h1, preferred_element_type=jnp.float32) + b2_ref[...]
    )                                                                   # (H, 1)
    uwb = (
        jnp.dot(w3p_ref[...], h2, preferred_element_type=jnp.float32) + b3p_ref[...]
    )                                                                   # (OUT, 1)

    # Static, vreg-aligned (width, 1) column slices of the live uwb value
    # (no scratch round-trip, no per-element views). u is already /width.
    u_cols = [uwb[d * width:(d + 1) * width, :] for d in range(io_dim)]
    w_cols = [uwb[bs + d * width: bs + (d + 1) * width, :] for d in range(io_dim)]
    b_col = uwb[2 * bs: 2 * bs + width, :]

    # ---- hot path: one (width, N) tile, batch on lanes ----
    # s[k, n] = w[k] . z[n] + b[k]   via io_dim broadcast-MACs
    s = w_cols[0] * zT_ref[0:1, :]                                      # (width, N)
    for d in range(1, io_dim):
        s = s + w_cols[d] * zT_ref[d:d + 1, :]
    s = s + b_col
    th = jnp.tanh(s)                                                    # ONE EUP push

    # dz[d, :] = sum_k u[k, d] * th[k, :]        (sublane-sum, XLU)
    dz_rows = [jnp.sum(u_cols[d] * th, axis=0, keepdims=True) for d in range(io_dim)]

    # trace[n] = sum_k (1 - th^2) * (u[k] . w[k])   (u already carries 1/width)
    uw_col = u_cols[0] * w_cols[0]                                      # (width, 1)
    for d in range(1, io_dim):
        uw_col = uw_col + u_cols[d] * w_cols[d]
    tr = jnp.sum(uw_col * (1.0 - th * th), axis=0, keepdims=True)       # (1, N)

    # One dense, lane-packed store of the whole (io_dim+1, N) slab.
    out_ref[...] = jnp.concatenate(dz_rows + [-tr], axis=0)


# ------------------------------ param preparation ----------------------------
def prepare_params(w1, b1, w2, b2, w3, b3, *, width, io_dim):
    """One-time prep: biases as columns, w3/b3 rows permuted role-major
    ([u_0|u_1|...|w_0|w_1|...|b] blocks of `width` rows), 1/width folded into
    the u rows. All free at param-prep time; kernel math is unchanged."""
    bs = width * io_dim
    out_dim = 2 * bs + width
    perm = np.empty(out_dim, dtype=np.int32)
    for d in range(io_dim):
        for k in range(width):
            perm[d * width + k] = k * io_dim + d            # u[k, d]
            perm[bs + d * width + k] = bs + k * io_dim + d  # w[k, d]
    perm[2 * bs:] = np.arange(2 * bs, out_dim)              # b[k] (unchanged)

    scale = np.ones((out_dim, 1), np.float32)
    scale[:bs, :] = 1.0 / width                             # fold mean over width into u

    perm_j = jnp.asarray(perm)
    scale_j = jnp.asarray(scale)
    w3p = w3[perm_j, :] * scale_j
    b3p = b3[perm_j].reshape(out_dim, 1) * scale_j
    return (w1, b1.reshape(-1, 1), w2, b2.reshape(-1, 1), w3p, b3p)


# --------------------------------- wrappers ----------------------------------
def cnf_forward_lane_dense(t, zT, kparams, *, width, io_dim):
    """Lane-dense entry point: zT is (io_dim, N); returns the packed
    (io_dim+1, N) slab (rows 0..io_dim-1 = dz_dt^T, last row = dlogpz_dt^T)."""
    w1, b1, w2, b2, w3p, b3p = kparams
    n = zT.shape[1]
    t2d = jnp.asarray(t, jnp.float32).reshape(1, 1)

    vmem = pl.BlockSpec(memory_space=pltpu.MemorySpace.VMEM)
    return pl.pallas_call(
        functools.partial(cnf_fused_kernel, width=width, io_dim=io_dim),
        out_shape=jax.ShapeDtypeStruct((io_dim + 1, n), jnp.float32),
        # no grid: whole problem is a few KB; a single block avoids per-step
        # overhead (add a lane-axis grid only if N grows to ~1e5+ rows, and on
        # v7x mark it "parallel" to use both TensorCores).
        in_specs=[pl.BlockSpec(memory_space=pltpu.MemorySpace.SMEM)]    # scalar t
                 + [vmem] * 7,                                          # weights + zT
        out_specs=vmem,
    )(t2d, w1, b1, w2, b2, w3p, b3p, zT)


def cnf_forward(t, z, kparams, *, width, io_dim):
    """PyTorch-layout CNF.forward(t, (z, logp)) -> (dz_dt, dlogpz_dt).

    `z` is (N, io_dim); transposes happen only at this boundary — an outer
    integrator should call cnf_forward_lane_dense and stay packed.
    """
    out = cnf_forward_lane_dense(t, jnp.transpose(z), kparams,
                                 width=width, io_dim=io_dim)
    dz_dt = jnp.transpose(out[:io_dim])               # (N, io_dim)
    dlogpz_dt = jnp.transpose(out[io_dim:])           # (N, 1)
    return dz_dt, dlogpz_dt


# ------------------------------ pure-JAX reference ---------------------------
def cnf_reference(t, z, torch_shaped_params, width, io_dim):
    """Mirrors the PyTorch math literally (autodiff for the Jacobian trace)."""
    w1, b1, w2, b2, w3, b3 = torch_shaped_params
    tt = jnp.reshape(jnp.asarray(t, jnp.float32), (1,))
    h = jnp.tanh(w1 @ tt + b1)
    h = jnp.tanh(w2 @ h + b2)
    uwb = w3 @ h + b3
    bs = width * io_dim
    u = uwb[:bs].reshape(width, 1, io_dim)
    w = uwb[bs:2 * bs].reshape(width, io_dim, 1)
    b = uwb[2 * bs:].reshape(width, 1, 1)

    z_ = jnp.broadcast_to(z[None], (width,) + z.shape)
    hmat = jnp.tanh(z_ @ w + b)                 # (width, N, 1)
    dz = jnp.mean(hmat @ u, axis=0)             # (N, io_dim)

    def f_single(zi):
        s = jnp.tanh(w[:, :, 0] @ zi + b[:, 0, 0])   # (width,)
        return (s @ u[:, 0, :]) / width              # (io_dim,)

    def tr_single(zi):
        return jnp.trace(jax.jacfwd(f_single)(zi))

    tr = jax.vmap(tr_single)(z).reshape(-1, 1)
    return dz, -tr


# ---------------------------------- main -------------------------------------
if __name__ == "__main__":
    key = jax.random.PRNGKey(0)
    ks = jax.random.split(key, 8)
    OUT = 2 * WIDTH * IO_DIM + WIDTH

    # Deterministic synthetic UWBNet parameters (PyTorch Linear shapes).
    w1 = jax.random.normal(ks[0], (HIDDEN, 1), jnp.float32)
    b1 = jax.random.normal(ks[1], (HIDDEN,), jnp.float32) * 0.1
    w2 = jax.random.normal(ks[2], (HIDDEN, HIDDEN), jnp.float32) / jnp.sqrt(HIDDEN)
    b2 = jax.random.normal(ks[3], (HIDDEN,), jnp.float32) * 0.1
    w3 = jax.random.normal(ks[4], (OUT, HIDDEN), jnp.float32) / jnp.sqrt(HIDDEN)
    b3 = jax.random.normal(ks[5], (OUT,), jnp.float32) * 0.1

    t = jnp.float32(0.5)
    z = jax.random.normal(ks[6], (N, IO_DIM), jnp.float32)

    # One-time param prep: role-major w3/b3 permutation + 1/width folding.
    kparams = prepare_params(w1, b1, w2, b2, w3, b3, width=WIDTH, io_dim=IO_DIM)

    fwd = jax.jit(functools.partial(cnf_forward, width=WIDTH, io_dim=IO_DIM))
    dz, dlogpz = fwd(t, z, kparams)
    jax.block_until_ready((dz, dlogpz))

    dz_ref, dlogpz_ref = cnf_reference(t, z, (w1, b1, w2, b2, w3, b3), WIDTH, IO_DIM)
    assert np.allclose(np.asarray(dz), np.asarray(dz_ref), atol=1e-3, rtol=1e-3)
    assert np.allclose(np.asarray(dlogpz), np.asarray(dlogpz_ref), atol=1e-3, rtol=1e-3)

    # TODO(synk): the odeint-based `flow`/`fit`/`log_prob` (adaptive dopri5)
    # drivers stay outside the kernel; a fixed-step integrator should hoist its
    # time loop into a grid axis (weights resident, dispatch amortized, lane-
    # dense state carried via cnf_forward_lane_dense) for the big end-to-end win.
    print("KERNEL_OK")
</pallas_src>

<mosaic_0001>
module attributes {stable_mosaic.version = 11 : i64} {
  func.func @cnf_fused_kernel(%arg0: memref<1x1xf32, #tpu.memory_space<smem>>, %arg1: memref<64x1xf32, #tpu.memory_space<vmem>>, %arg2: memref<64x1xf32, #tpu.memory_space<vmem>>, %arg3: memref<64x64xf32, #tpu.memory_space<vmem>>, %arg4: memref<64x1xf32, #tpu.memory_space<vmem>>, %arg5: memref<40x64xf32, #tpu.memory_space<vmem>>, %arg6: memref<40x1xf32, #tpu.memory_space<vmem>>, %arg7: memref<2x128xf32, #tpu.memory_space<vmem>>, %arg8: memref<3x128xf32, #tpu.memory_space<vmem>>) attributes {dimension_semantics = [], scalar_prefetch = 0 : i64, scratch_operands = 0 : i64, tpu.core_type = #tpu.core_type<tc>} {
    %c0 = arith.constant 0 : index
    %c0_0 = arith.constant 0 : index
    %0 = memref.load %arg0[%c0, %c0_0] : memref<1x1xf32, #tpu.memory_space<smem>>
    %c0_1 = arith.constant 0 : index
    %c0_2 = arith.constant 0 : index
    %1 = vector.load %arg1[%c0_1, %c0_2] : memref<64x1xf32, #tpu.memory_space<vmem>>, vector<64x1xf32>
    %2 = vector.broadcast %0 : f32 to vector<64x1xf32>
    %3 = arith.mulf %2, %1 : vector<64x1xf32>
    %c0_3 = arith.constant 0 : index
    %c0_4 = arith.constant 0 : index
    %4 = vector.load %arg2[%c0_3, %c0_4] : memref<64x1xf32, #tpu.memory_space<vmem>>, vector<64x1xf32>
    %5 = arith.addf %3, %4 : vector<64x1xf32>
    %6 = math.tanh %5 : vector<64x1xf32>
    %c0_5 = arith.constant 0 : index
    %c0_6 = arith.constant 0 : index
    %7 = vector.load %arg3[%c0_5, %c0_6] : memref<64x64xf32, #tpu.memory_space<vmem>>, vector<64x64xf32>
    %cst = arith.constant dense<0.000000e+00> : vector<64x1xf32>
    %8 = tpu.matmul %7, %6, %cst {dimension_numbers = #tpu.dot_dimension_numbers<[1], [0], [0], [1], [0, 0, 1, 1], [], []>} : vector<64x64xf32>, vector<64x1xf32>, vector<64x1xf32> -> vector<64x1xf32>
    %c0_7 = arith.constant 0 : index
    %c0_8 = arith.constant 0 : index
    %9 = vector.load %arg4[%c0_7, %c0_8] : memref<64x1xf32, #tpu.memory_space<vmem>>, vector<64x1xf32>
    %10 = arith.addf %8, %9 : vector<64x1xf32>
    %11 = math.tanh %10 : vector<64x1xf32>
    %c0_9 = arith.constant 0 : index
    %c0_10 = arith.constant 0 : index
    %12 = vector.load %arg5[%c0_9, %c0_10] : memref<40x64xf32, #tpu.memory_space<vmem>>, vector<40x64xf32>
    %cst_11 = arith.constant dense<0.000000e+00> : vector<40x1xf32>
    %13 = tpu.matmul %12, %11, %cst_11 {dimension_numbers = #tpu.dot_dimension_numbers<[1], [0], [0], [1], [0, 0, 1, 1], [], []>} : vector<40x64xf32>, vector<64x1xf32>, vector<40x1xf32> -> vector<40x1xf32>
    %c0_12 = arith.constant 0 : index
    %c0_13 = arith.constant 0 : index
    %14 = vector.load %arg6[%c0_12, %c0_13] : memref<40x1xf32, #tpu.memory_space<vmem>>, vector<40x1xf32>
    %15 = arith.addf %13, %14 : vector<40x1xf32>
    %16 = vector.extract_strided_slice %15 {offsets = [0, 0], sizes = [8, 1], strides = [1, 1]} : vector<40x1xf32> to vector<8x1xf32>
    %17 = vector.extract_strided_slice %15 {offsets = [8, 0], sizes = [8, 1], strides = [1, 1]} : vector<40x1xf32> to vector<8x1xf32>
    %18 = vector.extract_strided_slice %15 {offsets = [16, 0], sizes = [8, 1], strides = [1, 1]} : vector<40x1xf32> to vector<8x1xf32>
    %19 = vector.extract_strided_slice %15 {offsets = [24, 0], sizes = [8, 1], strides = [1, 1]} : vector<40x1xf32> to vector<8x1xf32>
    %20 = vector.extract_strided_slice %15 {offsets = [32, 0], sizes = [8, 1], strides = [1, 1]} : vector<40x1xf32> to vector<8x1xf32>
    %c0_14 = arith.constant 0 : index
    %c0_15 = arith.constant 0 : index
    %21 = vector.load %arg7[%c0_14, %c0_15] : memref<2x128xf32, #tpu.memory_space<vmem>>, vector<1x128xf32>
    %22 = vector.broadcast %18 : vector<8x1xf32> to vector<8x128xf32>
    %23 = vector.broadcast %21 : vector<1x128xf32> to vector<8x128xf32>
    %24 = arith.mulf %22, %23 : vector<8x128xf32>
    %c1 = arith.constant 1 : index
    %c0_16 = arith.constant 0 : index
    %25 = vector.load %arg7[%c1, %c0_16] : memref<2x128xf32, #tpu.memory_space<vmem>>, vector<1x128xf32>
    %26 = vector.broadcast %19 : vector<8x1xf32> to vector<8x128xf32>
    %27 = vector.broadcast %25 : vector<1x128xf32> to vector<8x128xf32>
    %28 = arith.mulf %26, %27 : vector<8x128xf32>
    %29 = arith.addf %24, %28 : vector<8x128xf32>
    %30 = vector.broadcast %20 : vector<8x1xf32> to vector<8x128xf32>
    %31 = arith.addf %29, %30 : vector<8x128xf32>
    %32 = math.tanh %31 : vector<8x128xf32>
    %33 = vector.broadcast %16 : vector<8x1xf32> to vector<8x128xf32>
    %34 = arith.mulf %33, %32 : vector<8x128xf32>
    %cst_17 = arith.constant dense<0.000000e+00> : vector<128xf32>
    %35 = vector.multi_reduction <add>, %34, %cst_17 [0] : vector<8x128xf32> to vector<128xf32>
    %36 = vector.shape_cast %35 : vector<128xf32> to vector<1x128xf32>
    %37 = vector.broadcast %17 : vector<8x1xf32> to vector<8x128xf32>
    %38 = arith.mulf %37, %32 : vector<8x128xf32>
    %cst_18 = arith.constant dense<0.000000e+00> : vector<128xf32>
    %39 = vector.multi_reduction <add>, %38, %cst_18 [0] : vector<8x128xf32> to vector<128xf32>
    %40 = vector.shape_cast %39 : vector<128xf32> to vector<1x128xf32>
    %41 = arith.mulf %16, %18 : vector<8x1xf32>
    %42 = arith.mulf %17, %19 : vector<8x1xf32>
    %43 = arith.addf %41, %42 : vector<8x1xf32>
    %44 = arith.mulf %32, %32 : vector<8x128xf32>
    %cst_19 = arith.constant 1.000000e+00 : f32
    %45 = vector.broadcast %cst_19 : f32 to vector<8x128xf32>
    %46 = arith.subf %45, %44 : vector<8x128xf32>
    %47 = vector.broadcast %43 : vector<8x1xf32> to vector<8x128xf32>
    %48 = arith.mulf %47, %46 : vector<8x128xf32>
    %cst_20 = arith.constant dense<0.000000e+00> : vector<128xf32>
    %49 = vector.multi_reduction <add>, %48, %cst_20 [0] : vector<8x128xf32> to vector<128xf32>
    %50 = vector.shape_cast %49 : vector<128xf32> to vector<1x128xf32>
    %cst_21 = arith.constant 0.000000e+00 : f32
    %51 = vector.broadcast %cst_21 : f32 to vector<1x128xf32>
    %52 = arith.subf %51, %50 : vector<1x128xf32>
    %53 = tpu.concatenate %36, %40, %52 in 0 : vector<1x128xf32>, vector<1x128xf32>, vector<1x128xf32> -> vector<3x128xf32>
    %c0_22 = arith.constant 0 : index
    %c0_23 = arith.constant 0 : index
    %54 = vector.load %arg8[%c0_22, %c0_23] : memref<3x128xf32, #tpu.memory_space<vmem>>, vector<3x128xf32>
    tpu.vector_store %arg8[%c0_22, %c0_23], %53 {strides = array<i32>} : memref<3x128xf32, #tpu.memory_space<vmem>>, vector<3x128xf32>,
    return
  }
}

</mosaic_0001>

<llo_original>
// kernel: cnf_forward.1
$region0: #{cnf_forward.1}
  #allocation0 [shape = 'u32[]', space=smem, size = 0x4, offset = 0x4, fixed_abs, tag = 'smem constant byte address 0x4 - core index']
  #allocation1 [shape = 'u32[144,128]{1,0:T(1,128)}', space=vmem, size = 0x12000, scoped, tag = 'internal scratch']
  #allocation2 [shape = 'f32[1,1]{1,0:T(1,128)S(6)}', space=smem, size = 0x200, scoped, tag = 'scoped memory for cnf_forward.1']
  %s0 = inlined_call_operand.<no memory space> [shape: f32[1,1], index: 0, kind: input, shape index: {}]
  %s1 = inlined_call_operand.vmem [shape: f32[64,1], index: 1, kind: input, shape index: {}]
  %s2 = inlined_call_operand.vmem [shape: f32[64,1], index: 2, kind: input, shape index: {}]
  %s3 = inlined_call_operand.vmem [shape: f32[64,64], index: 3, kind: input, shape index: {}]
  %s4 = inlined_call_operand.vmem [shape: f32[64,1], index: 4, kind: input, shape index: {}]
  %s5 = inlined_call_operand.vmem [shape: f32[40,64], index: 5, kind: input, shape index: {}]
  %s6 = inlined_call_operand.vmem [shape: f32[40,1], index: 6, kind: input, shape index: {}]
  %s7 = inlined_call_operand.vmem [shape: f32[2,128], index: 7, kind: input, shape index: {}]
  %s8 = inlined_call_operand.vmem [shape: f32[3,128], index: 8, kind: output, shape index: {}]
  %s9 = sld [smem:[#allocation0]]
  $region42: #{cnf_forward.1} parent=0
    _
  %s11 = ssub.s32 1, %s9
  %s12 = scalar_select 0, %s11, %s9
  %13 = sst [smem:[#allocation2]] %s0
  // Predicated region
  $region2: #{cnf_forward.1} parent=0 // pred_check
    _
  $region3: #{cnf_forward.1} parent=0 // pred_check_branch
    %15 = sbr.rel (0) target = $region5
  $region4: #{cnf_forward.1} parent=0 // pred_region
    _
  $region5: #{cnf_forward.1} parent=0 // pred_fallthru
    _
  // Predicated region
  $region6: #{cnf_forward.1} parent=0 // pred_check
    _
  $region7: #{cnf_forward.1} parent=0 // pred_check_branch
    %17 = sbr.rel (0) target = $region9
  $region8: #{cnf_forward.1} parent=0 // pred_region
    _
  $region9: #{cnf_forward.1} parent=0 // pred_fallthru
    _
  // Predicated region
  $region10: #{cnf_forward.1} parent=0 // pred_check
    _
  $region11: #{cnf_forward.1} parent=0 // pred_check_branch
    %19 = sbr.rel (0) target = $region13
  $region12: #{cnf_forward.1} parent=0 // pred_region
    _
  $region13: #{cnf_forward.1} parent=0 // pred_fallthru
    _
  // Predicated region
  $region14: #{cnf_forward.1} parent=0 // pred_check
    _
  $region15: #{cnf_forward.1} parent=0 // pred_check_branch
    %21 = sbr.rel (0) target = $region17
  $region16: #{cnf_forward.1} parent=0 // pred_region
    _
  $region17: #{cnf_forward.1} parent=0 // pred_fallthru
    _
  // Predicated region
  $region18: #{cnf_forward.1} parent=0 // pred_check
    _
  $region19: #{cnf_forward.1} parent=0 // pred_check_branch
    %23 = sbr.rel (0) target = $region21
  $region20: #{cnf_forward.1} parent=0 // pred_region
    _
  $region21: #{cnf_forward.1} parent=0 // pred_fallthru
    _
  // Predicated region
  $region22: #{cnf_forward.1} parent=0 // pred_check
    _
  $region23: #{cnf_forward.1} parent=0 // pred_check_branch
    %25 = sbr.rel (0) target = $region25
  $region24: #{cnf_forward.1} parent=0 // pred_region
    _
  $region25: #{cnf_forward.1} parent=0 // pred_fallthru
    _
  // Predicated region
  $region26: #{cnf_forward.1} parent=0 // pred_check
    _
  $region27: #{cnf_forward.1} parent=0 // pred_check_branch
    %27 = sbr.rel (0) target = $region29
  $region28: #{cnf_forward.1} parent=0 // pred_region
    _
  $region29: #{cnf_forward.1} parent=0 // pred_fallthru
    _
  // Predicated region
  $region30: #{cnf_forward.1} parent=0 // pred_check
    _
  $region31: #{cnf_forward.1} parent=0 // pred_check_branch
    %29 = sbr.rel (0) target = $region33
  $region32: #{cnf_forward.1} parent=0 // pred_region
    _
  $region33: #{cnf_forward.1} parent=0 // pred_fallthru
    _
  %s30 = sld [smem:[#allocation2]]
  %v31 = vld [vmem:[%s1] sm:$0xff]
  %v32 = vld [vmem:[%s1 + $0x8] sm:$0xff]
  %v33 = vld [vmem:[%s1 + $0x10] sm:$0xff]
  %v34 = vld [vmem:[%s1 + $0x18] sm:$0xff]
  %v35 = vld [vmem:[%s1 + $0x20] sm:$0xff]
  %v36 = vld [vmem:[%s1 + $0x28] sm:$0xff]
  %v37 = vld [vmem:[%s1 + $0x30] sm:$0xff]
  %v38 = vld [vmem:[%s1 + $0x38] sm:$0xff]
  %v39 = vstv %s30
  %v40 = vmul.f32 %v39, %v31
  %v41 = vmul.f32 %v39, %v32
  %v42 = vmul.f32 %v39, %v33
  %v43 = vmul.f32 %v39, %v34
  %v44 = vmul.f32 %v39, %v35
  %v45 = vmul.f32 %v39, %v36
  %v46 = vmul.f32 %v39, %v37
  %v47 = vmul.f32 %v39, %v38
  %v48 = vld [vmem:[%s2] sm:$0xff]
  %v49 = vld [vmem:[%s2 + $0x8] sm:$0xff]
  %v50 = vld [vmem:[%s2 + $0x10] sm:$0xff]
  %v51 = vld [vmem:[%s2 + $0x18] sm:$0xff]
  %v52 = vld [vmem:[%s2 + $0x20] sm:$0xff]
  %v53 = vld [vmem:[%s2 + $0x28] sm:$0xff]
  %v54 = vld [vmem:[%s2 + $0x30] sm:$0xff]
  %v55 = vld [vmem:[%s2 + $0x38] sm:$0xff]
  %v56 = vadd.f32 %v40, %v48
  %v57 = vadd.f32 %v41, %v49
  %v58 = vadd.f32 %v42, %v50
  %v59 = vadd.f32 %v43, %v51
  %v60 = vadd.f32 %v44, %v52
  %v61 = vadd.f32 %v45, %v53
  %v62 = vadd.f32 %v46, %v54
  %v63 = vadd.f32 %v47, %v55
  %v64 = vtanh.pop %v56
  %v65 = vtanh.pop %v57
  %v66 = vtanh.pop %v58
  %v67 = vtanh.pop %v59
  %v68 = vtanh.pop %v60
  %v69 = vtanh.pop %v61
  %v70 = vtanh.pop %v62
  %v71 = vtanh.pop %v63
  %v72 = vld [vmem:[%s3] sm:$0xff]
  %v73 = vld [vmem:[%s3 + $0x8] sm:$0xff]
  %v74 = vld [vmem:[%s3 + $0x10] sm:$0xff]
  %v75 = vld [vmem:[%s3 + $0x18] sm:$0xff]
  %v76 = vld [vmem:[%s3 + $0x20] sm:$0xff]
  %v77 = vld [vmem:[%s3 + $0x28] sm:$0xff]
  %v78 = vld [vmem:[%s3 + $0x30] sm:$0xff]
  %v79 = vld [vmem:[%s3 + $0x38] sm:$0xff]
  %v80 = vld [vmem:[%s4] sm:$0xff]
  %v81 = vld [vmem:[%s4 + $0x8] sm:$0xff]
  %v82 = vld [vmem:[%s4 + $0x10] sm:$0xff]
  %v83 = vld [vmem:[%s4 + $0x18] sm:$0xff]
  %v84 = vld [vmem:[%s4 + $0x20] sm:$0xff]
  %v85 = vld [vmem:[%s4 + $0x28] sm:$0xff]
  %v86 = vld [vmem:[%s4 + $0x30] sm:$0xff]
  %v87 = vld [vmem:[%s4 + $0x38] sm:$0xff]
  %vm88 = vcmask 523264
  %v90 = vsel %vm88, %v72, 0
  %v93 = vsel %vm88, %v73, 0
  %v96 = vsel %vm88, %v74, 0
  %v99 = vsel %vm88, %v75, 0
  %v102 = vsel %vm88, %v76, 0
  %v105 = vsel %vm88, %v77, 0
  %v108 = vsel %vm88, %v78, 0
  %v111 = vsel %vm88, %v79, 0
  %113 = vmatprep.subr.mxu0 0.0
  %114 = vmatpush1.msra.mxu0 0.0
  %115 = vmatprep.subr.mxu0 0.0
  %116 = vmatpush1.msra.mxu0 0.0
  %117 = vmatprep.subr.mxu0 0.0
  %118 = vmatpush1.msra.mxu0 0.0
  %119 = vmatprep.subr.mxu0 0.0
  %120 = vmatpush1.msra.mxu0 0.0
  %121 = vmatprep.subr.mxu0 0.0
  %122 = vmatpush1.msra.mxu0 0.0
  %123 = vmatprep.subr.mxu0 0.0
  %124 = vmatpush1.msra.mxu0 0.0
  %125 = vmatprep.subr.mxu0 0.0
  %126 = vmatpush1.msra.mxu0 0.0
  %127 = vmatprep.subr.mxu0 0.0
  %128 = vmatpush1.msra.mxu0 0.0
  %129 = vmatprep.subr.mxu0 0.0
  %130 = vmatpush1.msra.mxu0 %v71
  %131 = vmatprep.subr.mxu0 0.0
  %132 = vmatpush1.msra.mxu0 %v70
  %133 = vmatprep.subr.mxu0 0.0
  %134 = vmatpush1.msra.mxu0 %v69
  %135 = vmatprep.subr.mxu0 0.0
  %136 = vmatpush1.msra.mxu0 %v68
  %137 = vmatprep.subr.mxu0 0.0
  %138 = vmatpush1.msra.mxu0 %v67
  %139 = vmatprep.subr.mxu0 0.0
  %140 = vmatpush1.msra.mxu0 %v66
  %141 = vmatprep.subr.mxu0 0.0
  %142 = vmatpush1.msra.mxu0 %v65
  %143 = vmatprep.subr.mxu0 0.0
  %144 = vmatpush1.msra.mxu0 %v64
  %145 = vmatprep.subr.mxu0 0.0
  %146 = vmatpush2.msra.mxu0 0.0
  %147 = vmatprep.subr.mxu0 0.0
  %148 = vmatpush2.msra.mxu0 0.0
  %149 = vmatprep.subr.mxu0 0.0
  %150 = vmatpush2.msra.mxu0 0.0
  %151 = vmatprep.subr.mxu0 0.0
  %152 = vmatpush2.msra.mxu0 0.0
  %153 = vmatprep.subr.mxu0 0.0
  %154 = vmatpush2.msra.mxu0 0.0
  %155 = vmatprep.subr.mxu0 0.0
  %156 = vmatpush2.msra.mxu0 0.0
  %157 = vmatprep.subr.mxu0 0.0
  %158 = vmatpush2.msra.mxu0 0.0
  %159 = vmatprep.subr.mxu0 0.0
  %160 = vmatpush2.msra.mxu0 0.0
  %161 = vmatprep.subr.mxu0 0.0
  %162 = vmatpush2.msra.mxu0 0.0
  %163 = vmatprep.subr.mxu0 0.0
  %164 = vmatpush2.msra.mxu0 0.0
  %165 = vmatprep.subr.mxu0 0.0
  %166 = vmatpush2.msra.mxu0 0.0
  %167 = vmatprep.subr.mxu0 0.0
  %168 = vmatpush2.msra.mxu0 0.0
  %169 = vmatprep.subr.mxu0 0.0
  %170 = vmatpush2.msra.mxu0 0.0
  %171 = vmatprep.subr.mxu0 0.0
  %172 = vmatpush2.msra.mxu0 0.0
  %173 = vmatprep.subr.mxu0 0.0
  %174 = vmatpush2.msra.mxu0 0.0
  %175 = vmatprep.subr.mxu0 0.0
  %176 = vmatpush2.msra.mxu0 0.0
  %177 = vmatprep.mubr.f32.mxu0 0.0
  %178 = vmatmul.mubr.f32.gmra.mxu0 %v90
  %v179 = vpop.f32.mrf.mxu0
  %v180 = vadd.f32 %v80, %v179
  %v181 = vpop.f32.mrf.mxu0
  %182 = vmatprep.mubr.f32.mxu0 0.0
  %183 = vmatmul.mubr.f32.gmra.mxu0 %v93
  %v184 = vpop.f32.mrf.mxu0
  %v185 = vadd.f32 %v81, %v184
  %v186 = vpop.f32.mrf.mxu0
  %187 = vmatprep.mubr.f32.mxu0 0.0
  %188 = vmatmul.mubr.f32.gmra.mxu0 %v96
  %v189 = vpop.f32.mrf.mxu0
  %v190 = vadd.f32 %v82, %v189
  %v191 = vpop.f32.mrf.mxu0
  %192 = vmatprep.mubr.f32.mxu0 0.0
  %193 = vmatmul.mubr.f32.gmra.mxu0 %v99
  %v194 = vpop.f32.mrf.mxu0
  %v195 = vadd.f32 %v83, %v194
  %v196 = vpop.f32.mrf.mxu0
  %197 = vmatprep.mubr.f32.mxu0 0.0
  %198 = vmatmul.mubr.f32.gmra.mxu0 %v102
  %v199 = vpop.f32.mrf.mxu0
  %v200 = vadd.f32 %v84, %v199
  %v201 = vpop.f32.mrf.mxu0
  %202 = vmatprep.mubr.f32.mxu0 0.0
  %203 = vmatmul.mubr.f32.gmra.mxu0 %v105
  %v204 = vpop.f32.mrf.mxu0
  %v205 = vadd.f32 %v85, %v204
  %v206 = vpop.f32.mrf.mxu0
  %207 = vmatprep.mubr.f32.mxu0 0.0
  %208 = vmatmul.mubr.f32.gmra.mxu0 %v108
  %v209 = vpop.f32.mrf.mxu0
  %v210 = vadd.f32 %v86, %v209
  %v211 = vpop.f32.mrf.mxu0
  %212 = vmatprep.mubr.f32.mxu0 0.0
  %213 = vmatmul.mubr.f32.gmra.mxu0 %v111
  %v214 = vpop.f32.mrf.mxu0
  %v215 = vadd.f32 %v87, %v214
  %v216 = vpop.f32.mrf.mxu0
  %217 = vdwg.mxu0
  %v218 = vtanh.pop %v180
  %v219 = vtanh.pop %v185
  %v220 = vtanh.pop %v190
  %v221 = vtanh.pop %v195
  %v222 = vtanh.pop %v200
  %v223 = vtanh.pop %v205
  %v224 = vtanh.pop %v210
  %v225 = vtanh.pop %v215
  %v226 = vld [vmem:[%s5] sm:$0xff]
  %v227 = vld [vmem:[%s5 + $0x8] sm:$0xff]
  %v228 = vld [vmem:[%s5 + $0x10] sm:$0xff]
  %v229 = vld [vmem:[%s5 + $0x18] sm:$0xff]
  %v230 = vld [vmem:[%s5 + $0x20] sm:$0xff]
  %v231 = vld [vmem:[%s6] sm:$0xff]
  %v232 = vld [vmem:[%s6 + $0x8] sm:$0xff]
  %v233 = vld [vmem:[%s6 + $0x10] sm:$0xff]
  %v234 = vld [vmem:[%s6 + $0x18] sm:$0xff]
  %v235 = vld [vmem:[%s6 + $0x20] sm:$0xff]
  %v237 = vsel %vm88, %v226, 0
  %v240 = vsel %vm88, %v227, 0
  %v243 = vsel %vm88, %v228, 0
  %v246 = vsel %vm88, %v229, 0
  %v249 = vsel %vm88, %v230, 0
  %251 = vmatprep.subr.mxu0 0.0
  %252 = vmatpush1.msra.mxu0 0.0
  %253 = vmatprep.subr.mxu0 0.0
  %254 = vmatpush1.msra.mxu0 0.0
  %255 = vmatprep.subr.mxu0 0.0
  %256 = vmatpush1.msra.mxu0 0.0
  %257 = vmatprep.subr.mxu0 0.0
  %258 = vmatpush1.msra.mxu0 0.0
  %259 = vmatprep.subr.mxu0 0.0
  %260 = vmatpush1.msra.mxu0 0.0
  %261 = vmatprep.subr.mxu0 0.0
  %262 = vmatpush1.msra.mxu0 0.0
  %263 = vmatprep.subr.mxu0 0.0
  %264 = vmatpush1.msra.mxu0 0.0
  %265 = vmatprep.subr.mxu0 0.0
  %266 = vmatpush1.msra.mxu0 0.0
  %267 = vmatprep.subr.mxu0 0.0
  %268 = vmatpush1.msra.mxu0 %v225
  %269 = vmatprep.subr.mxu0 0.0
  %270 = vmatpush1.msra.mxu0 %v224
  %271 = vmatprep.subr.mxu0 0.0
  %272 = vmatpush1.msra.mxu0 %v223
  %273 = vmatprep.subr.mxu0 0.0
  %274 = vmatpush1.msra.mxu0 %v222
  %275 = vmatprep.subr.mxu0 0.0
  %276 = vmatpush1.msra.mxu0 %v221
  %277 = vmatprep.subr.mxu0 0.0
  %278 = vmatpush1.msra.mxu0 %v220
  %279 = vmatprep.subr.mxu0 0.0
  %280 = vmatpush1.msra.mxu0 %v219
  %281 = vmatprep.subr.mxu0 0.0
  %282 = vmatpush1.msra.mxu0 %v218
  %283 = vmatprep.subr.mxu0 0.0
  %284 = vmatpush2.msra.mxu0 0.0
  %285 = vmatprep.subr.mxu0 0.0
  %286 = vmatpush2.msra.mxu0 0.0
  %287 = vmatprep.subr.mxu0 0.0
  %288 = vmatpush2.msra.mxu0 0.0
  %289 = vmatprep.subr.mxu0 0.0
  %290 = vmatpush2.msra.mxu0 0.0
  %291 = vmatprep.subr.mxu0 0.0
  %292 = vmatpush2.msra.mxu0 0.0
  %293 = vmatprep.subr.mxu0 0.0
  %294 = vmatpush2.msra.mxu0 0.0
  %295 = vmatprep.subr.mxu0 0.0
  %296 = vmatpush2.msra.mxu0 0.0
  %297 = vmatprep.subr.mxu0 0.0
  %298 = vmatpush2.msra.mxu0 0.0
  %299 = vmatprep.subr.mxu0 0.0
  %300 = vmatpush2.msra.mxu0 0.0
  %301 = vmatprep.subr.mxu0 0.0
  %302 = vmatpush2.msra.mxu0 0.0
  %303 = vmatprep.subr.mxu0 0.0
  %304 = vmatpush2.msra.mxu0 0.0
  %305 = vmatprep.subr.mxu0 0.0
  %306 = vmatpush2.msra.mxu0 0.0
  %307 = vmatprep.subr.mxu0 0.0
  %308 = vmatpush2.msra.mxu0 0.0
  %309 = vmatprep.subr.mxu0 0.0
  %310 = vmatpush2.msra.mxu0 0.0
  %311 = vmatprep.subr.mxu0 0.0
  %312 = vmatpush2.msra.mxu0 0.0
  %313 = vmatprep.subr.mxu0 0.0
  %314 = vmatpush2.msra.mxu0 0.0
  %315 = vmatprep.mubr.f32.mxu0 0.0
  %316 = vmatmul.mubr.f32.gmra.mxu0 %v237
  %v317 = vpop.f32.mrf.mxu0
  %v318 = vadd.f32 %v231, %v317
  %v319 = vpop.f32.mrf.mxu0
  %320 = vmatprep.mubr.f32.mxu0 0.0
  %321 = vmatmul.mubr.f32.gmra.mxu0 %v240
  %v322 = vpop.f32.mrf.mxu0
  %v323 = vadd.f32 %v232, %v322
  %v324 = vpop.f32.mrf.mxu0
  %325 = vmatprep.mubr.f32.mxu0 0.0
  %326 = vmatmul.mubr.f32.gmra.mxu0 %v243
  %v327 = vpop.f32.mrf.mxu0
  %v328 = vadd.f32 %v233, %v327
  %v329 = vpop.f32.mrf.mxu0
  %330 = vmatprep.mubr.f32.mxu0 0.0
  %331 = vmatmul.mubr.f32.gmra.mxu0 %v246
  %v332 = vpop.f32.mrf.mxu0
  %v333 = vadd.f32 %v234, %v332
  %v334 = vpop.f32.mrf.mxu0
  %335 = vmatprep.mubr.f32.mxu0 0.0
  %336 = vmatmul.mubr.f32.gmra.mxu0 %v249
  %v337 = vpop.f32.mrf.mxu0
  %v338 = vadd.f32 %v235, %v337
  %v339 = vpop.f32.mrf.mxu0
  %340 = vdwg.mxu0
  %v341 = vld [vmem:[%s7] sm:$0x1]
  %343 = vset.pattern.permute.xlu0 0
  %344 = vperm.xlu0 %343, %v328
  %v345 = vpop.permute.xlu0 %344
  %v347 = vlaneseq
  %v348 = vshrl.u32 %v347, 7
  %v349 = vsub.s32 0, %v348
  %v350 = vrot.slane %v341, %v349
  %v351 = vmul.f32 %v345, %v350
  %v352 = vld [vmem:[%s7 + $0x1] sm:$0x1]
  %354 = vset.pattern.permute.xlu0 0
  %355 = vperm.xlu0 %354, %v333
  %v356 = vpop.permute.xlu0 %355
  %v358 = vlaneseq
  %v359 = vshrl.u32 %v358, 7
  %v360 = vsub.s32 0, %v359
  %v361 = vrot.slane %v352, %v360
  %v362 = vmul.f32 %v356, %v361
  %v363 = vadd.f32 %v351, %v362
  %365 = vset.pattern.permute.xlu0 0
  %366 = vperm.xlu0 %365, %v338
  %v367 = vpop.permute.xlu0 %366
  %v369 = vadd.f32 %v363, %v367
  %v370 = vtanh.pop %v369
  %372 = vset.pattern.permute.xlu0 0
  %373 = vperm.xlu0 %372, %v318
  %v374 = vpop.permute.xlu0 %373
  %v376 = vmul.f32 %v374, %v370
  %v377 = vrot.slane %v376, 4
  %v378 = vadd.f32 %v376, %v377
  %v379 = vrot.slane %v378, 2
  %v380 = vadd.f32 %v378, %v379
  %v381 = vrot.slane %v380, 1
  %v382 = vadd.f32 %v380, %v381
  %384 = vset.pattern.permute.xlu0 0
  %385 = vperm.xlu0 %384, %v323
  %v386 = vpop.permute.xlu0 %385
  %v388 = vmul.f32 %v386, %v370
  %v389 = vrot.slane %v388, 4
  %v390 = vadd.f32 %v388, %v389
  %v391 = vrot.slane %v390, 2
  %v392 = vadd.f32 %v390, %v391
  %v393 = vrot.slane %v392, 1
  %v394 = vadd.f32 %v392, %v393
  %v395 = vmul.f32 %v318, %v328
  %v396 = vmul.f32 %v323, %v333
  %v397 = vadd.f32 %v395, %v396
  %v398 = vmul.f32 %v370, %v370
  %v399 = vsub.f32 1.0, %v398
  %401 = vset.pattern.permute.xlu0 0
  %402 = vperm.xlu0 %401, %v397
  %v403 = vpop.permute.xlu0 %402
  %v405 = vmul.f32 %v403, %v399
  %v406 = vrot.slane %v405, 4
  %v407 = vadd.f32 %v405, %v406
  %v408 = vrot.slane %v407, 2
  %v409 = vadd.f32 %v407, %v408
  %v410 = vrot.slane %v409, 1
  %v411 = vadd.f32 %v409, %v410
  %v412 = vsub.f32 0.0, %v411
  %vm413 = vcmask 1040384
  %v414 = vsel %vm413, %v382, %v394
  %vm415 = vcmask 1041408
  %v416 = vsel %vm415, %v414, %v412
  %417 = vst [vmem:[%s8] sm:$0x7] %v416
  // Predicated region
  $region34: #{cnf_forward.1} parent=0 // pred_check
    _
  $region35: #{cnf_forward.1} parent=0 // pred_check_branch
    %419 = sbr.rel (0) target = $region37
  $region36: #{cnf_forward.1} parent=0 // pred_region
    _
  $region37: #{cnf_forward.1} parent=0 // pred_fallthru
    _
  // Predicated region
  $region38: #{cnf_forward.1} parent=0 // pred_check
    _
  $region39: #{cnf_forward.1} parent=0 // pred_check_branch
    %421 = sbr.rel (0) target = $region41
  $region40: #{cnf_forward.1} parent=0 // pred_region
    _
  $region41: #{cnf_forward.1} parent=0 // pred_fallthru
    _

</llo_original>
